<compile_context>
chip_gen: v7x
topology: tpu7x:2x2x1
jax: 0.10.0
libtpu: 0.0.40
codegen_flags: <defaults>
</compile_context>

<pallas_src>
import jax
import jax.numpy as jnp
from jax.experimental import pallas as pl
from jax.experimental.pallas import tpu as pltpu


def _mse_loss_kernel(x_ref, w_ref, b_ref, y_ref, part_ref, acc_ref):
    """One (i, j, k) grid step of the fused linear+MSE loss.

    x_ref:   (TB, TK) bf16   input tile
    w_ref:   (TK, TO) bf16   weight tile
    b_ref:   (1,  TO) f32    bias tile (grid-invariant along i, k)
    y_ref:   (TB, TO) f32    label tile
    part_ref:(8, 128) f32    per-(i,j) partial sum-of-squares slab
    acc_ref: (TB, TO) f32    matmul accumulator scratch (persists over k)
    """
    k = pl.program_id(2)
    nk = pl.num_programs(2)

    @pl.when(k == 0)
    def _():
        acc_ref[...] = jnp.zeros_like(acc_ref)

    # bf16 x bf16 -> f32 accumulate on the MXU.
    acc_ref[...] += jnp.dot(
        x_ref[...], w_ref[...], preferred_element_type=jnp.float32
    )

    @pl.when(k == nk - 1)
    def _():
        # Bias added exactly once at K-finalize; residual / square / reduce in f32.
        pred = acc_ref[...] + b_ref[...]
        diff = pred - y_ref[...]
        d2 = diff * diff
        tb, to = d2.shape  # static tile sizes

        # Pure-VALU partial reduction into one (8,128) vreg slab.
        # Static slices sit exactly on (8,128) vreg boundaries -> zero-cost
        # views, no XLU cross-lane/sublane reduce, no broadcast.
        acc8 = d2[0:8, :]
        for r in range(1, tb // 8):
            acc8 = acc8 + d2[r * 8:(r + 1) * 8, :]
        part = acc8[:, 0:128]
        for c in range(1, to // 128):
            part = part + acc8[:, c * 128:(c + 1) * 128]
        part_ref[...] = part


def _pick_tile(dim, pref, quantum):
    """Largest multiple of `quantum` that divides `dim` and is <= max(pref, quantum)."""
    t = min(pref, dim)
    t = max(quantum, (t // quantum) * quantum)
    while dim % t:
        t -= quantum
    return t


def dist_wrapper_loss(inputs, labels, W, b, *, tb=256, to=512, tk=512):
    """Equivalent of DistWrapper(model)(inputs, labels) for a linear+MSE model."""
    B, H = inputs.shape
    O = labels.shape[1]
    assert W.shape == (H, O) and b.shape == (O,)
    # Lane-dense layout requirements (pad upstream if violated).
    assert B % 8 == 0 and H % 128 == 0 and O % 128 == 0

    # Shape-aware tiles: small problems collapse to a 1-step grid; large
    # problems get full MXU-amortizing tiles.
    tb = _pick_tile(B, tb, 8)
    tk = _pick_tile(H, tk, 128)
    to = _pick_tile(O, to, 128)
    nb, no, nk = B // tb, O // to, H // tk

    # bf16 operands for the MXU; labels / bias stay f32 for the reduction.
    # TODO(synk): optionally stream labels as bf16 (halves the B*O*4 HBM read)
    # at the cost of quantizing y; kept f32 to match the f32 reference loss.
    x_bf = inputs.astype(jnp.bfloat16)
    w_bf = W.astype(jnp.bfloat16)
    b2 = b.reshape(1, O).astype(jnp.float32)
    y = labels.astype(jnp.float32)

    # Actual DMA traffic (x re-read per output-column tile, W per row tile).
    bytes_accessed = (
        B * H * 2 * no          # inputs (bf16)
        + H * O * 2 * nb        # W (bf16)
        + B * O * 4             # labels (f32)
        + O * 4 * nb * nk       # bias
        + nb * no * 8 * 128 * 4 # partial-sum slabs out
    )

    partials = pl.pallas_call(
        _mse_loss_kernel,
        out_shape=jax.ShapeDtypeStruct((nb * 8, no * 128), jnp.float32),
        grid_spec=pltpu.PrefetchScalarGridSpec(
            num_scalar_prefetch=0,
            grid=(nb, no, nk),  # K (reduction) axis last
            in_specs=[
                pl.BlockSpec((tb, tk), lambda i, j, k: (i, k)),   # inputs
                pl.BlockSpec((tk, to), lambda i, j, k: (k, j)),   # W
                pl.BlockSpec((1, to), lambda i, j, k: (0, j)),    # bias (hoisted)
                pl.BlockSpec((tb, to), lambda i, j, k: (i, j)),   # labels
            ],
            out_specs=pl.BlockSpec((8, 128), lambda i, j, k: (i, j)),
            scratch_shapes=[pltpu.VMEM((tb, to), jnp.float32)],
        ),
        compiler_params=pltpu.CompilerParams(
            # B/O tiles are independent -> megacore-parallel on v7x;
            # K is a carried reduction -> arbitrary.
            dimension_semantics=("parallel", "parallel", "arbitrary"),
            # ~3 MiB double-buffered working set at default tiles; 32 MiB is
            # ample headroom and safe even against v7x's 64 MiB physical VMEM.
            vmem_limit_bytes=32 * 1024 * 1024,
        ),
        cost_estimate=pl.CostEstimate(
            flops=2 * B * H * O,
            transcendentals=0,
            bytes_accessed=bytes_accessed,
        ),
    )(x_bf, w_bf, b2, y)

    # Each (i, j) tile's squared-residual sum is spread over one (8,128) slab;
    # summing all slabs gives the exact global sum of squares.  Single multiply
    # by the compile-time constant 1/(B*O) normalizes to the mean.
    inv_n = 1.0 / (float(B) * float(O))
    return jnp.sum(partials) * jnp.float32(inv_n)


# TODO(synk): DistWrapper.save/load (checkpoint I/O) and delegation to an
# arbitrary wrapped model's .loss have no Pallas equivalent; a concrete
# linear+MSE wrapped model is implemented instead.


if __name__ == "__main__":
    # Small, lane-dense shapes (B % 8 == 0, H/O % 128 == 0).  H=1024 gives a
    # 2-step K reduction so the accumulator init/finalize path is exercised;
    # shape-aware tiling collapses the rest to a single (1,1,2) grid.
    B, H, O = 64, 1024, 256
    key = jax.random.PRNGKey(0)
    k_x, k_y, k_w, k_b = jax.random.split(key, 4)

    inputs = jax.random.normal(k_x, (B, H), dtype=jnp.float32)
    labels = jax.random.normal(k_y, (B, O), dtype=jnp.float32)
    W = jax.random.normal(k_w, (H, O), dtype=jnp.float32) * 0.1
    b = jax.random.normal(k_b, (O,), dtype=jnp.float32) * 0.1

    loss = dist_wrapper_loss(inputs, labels, W, b)
    jax.block_until_ready(loss)

    # Reference in plain f32 JAX; tolerance accounts for bf16 MXU operands.
    ref = jnp.mean((inputs @ W + b[None, :] - labels) ** 2)
    assert jnp.allclose(loss, ref, rtol=2e-2, atol=1e-2), (loss, ref)

    print("KERNEL_OK")
</pallas_src>

<mosaic_0001>
module attributes {stable_mosaic.version = 11 : i64} {
  func.func @_mse_loss_kernel(%arg0: i32, %arg1: i32, %arg2: i32, %arg3: memref<64x512xbf16, #tpu.memory_space<vmem>>, %arg4: memref<512x256xbf16, #tpu.memory_space<vmem>>, %arg5: memref<1x256xf32, #tpu.memory_space<vmem>>, %arg6: memref<64x256xf32, #tpu.memory_space<vmem>>, %arg7: memref<8x128xf32, #tpu.memory_space<vmem>>, %arg8: memref<64x256xf32, #tpu.memory_space<vmem>>) attributes {dimension_semantics = [#tpu.dimension_semantics<parallel>, #tpu.dimension_semantics<parallel>, #tpu.dimension_semantics<arbitrary>], iteration_bounds = array<i64: 1, 1, 2>, scalar_prefetch = 0 : i64, scratch_operands = 1 : i64, tpu.core_type = #tpu.core_type<tc>, window_params = [{transform_indices = @transform_0, window_bounds = array<i64: 64, 512>}, {transform_indices = @transform_1, window_bounds = array<i64: 512, 256>}, {transform_indices = @transform_2, window_bounds = array<i64: 1, 256>}, {transform_indices = @transform_3, window_bounds = array<i64: 64, 256>}, {transform_indices = @transform_4, window_bounds = array<i64: 8, 128>}]} {
    %c0_i32 = arith.constant 0 : i32
    %0 = arith.cmpi eq, %arg2, %c0_i32 : i32
    %1 = arith.extui %0 : i1 to i32
    %c0_i32_0 = arith.constant 0 : i32
    %2 = arith.cmpi ne, %1, %c0_i32_0 : i32
    scf.if %2 {
      %cst_9 = arith.constant 0.000000e+00 : f32
      %12 = vector.broadcast %cst_9 : f32 to vector<64x256xf32>
      %c0_10 = arith.constant 0 : index
      %c0_11 = arith.constant 0 : index
      %13 = vector.load %arg8[%c0_10, %c0_11] : memref<64x256xf32, #tpu.memory_space<vmem>>, vector<64x256xf32>
      tpu.vector_store %arg8[%c0_10, %c0_11], %12 {strides = array<i32>} : memref<64x256xf32, #tpu.memory_space<vmem>>, vector<64x256xf32>,
    } else {
    }
    %c0 = arith.constant 0 : index
    %c0_1 = arith.constant 0 : index
    %3 = vector.load %arg8[%c0, %c0_1] : memref<64x256xf32, #tpu.memory_space<vmem>>, vector<64x256xf32>
    %c0_2 = arith.constant 0 : index
    %c0_3 = arith.constant 0 : index
    %4 = vector.load %arg3[%c0_2, %c0_3] : memref<64x512xbf16, #tpu.memory_space<vmem>>, vector<64x512xbf16>
    %c0_4 = arith.constant 0 : index
    %c0_5 = arith.constant 0 : index
    %5 = vector.load %arg4[%c0_4, %c0_5] : memref<512x256xbf16, #tpu.memory_space<vmem>>, vector<512x256xbf16>
    %cst = arith.constant dense<0.000000e+00> : vector<64x256xf32>
    %6 = tpu.matmul %4, %5, %cst {dimension_numbers = #tpu.dot_dimension_numbers<[1], [0], [0], [1], [0, 0, 1, 1], [], []>} : vector<64x512xbf16>, vector<512x256xbf16>, vector<64x256xf32> -> vector<64x256xf32>
    %7 = arith.addf %3, %6 : vector<64x256xf32>
    %c0_6 = arith.constant 0 : index
    %c0_7 = arith.constant 0 : index
    %8 = vector.load %arg8[%c0_6, %c0_7] : memref<64x256xf32, #tpu.memory_space<vmem>>, vector<64x256xf32>
    tpu.vector_store %arg8[%c0_6, %c0_7], %7 {strides = array<i32>} : memref<64x256xf32, #tpu.memory_space<vmem>>, vector<64x256xf32>,
    %c1_i32 = arith.constant 1 : i32
    %9 = arith.cmpi eq, %arg2, %c1_i32 : i32
    %10 = arith.extui %9 : i1 to i32
    %c0_i32_8 = arith.constant 0 : i32
    %11 = arith.cmpi ne, %10, %c0_i32_8 : i32
    scf.if %11 {
      %c0_9 = arith.constant 0 : index
      %c0_10 = arith.constant 0 : index
      %12 = vector.load %arg8[%c0_9, %c0_10] : memref<64x256xf32, #tpu.memory_space<vmem>>, vector<64x256xf32>
      %c0_11 = arith.constant 0 : index
      %c0_12 = arith.constant 0 : index
      %13 = vector.load %arg5[%c0_11, %c0_12] : memref<1x256xf32, #tpu.memory_space<vmem>>, vector<1x256xf32>
      %14 = vector.broadcast %13 : vector<1x256xf32> to vector<64x256xf32>
      %15 = arith.addf %12, %14 : vector<64x256xf32>
      %c0_13 = arith.constant 0 : index
      %c0_14 = arith.constant 0 : index
      %16 = vector.load %arg6[%c0_13, %c0_14] : memref<64x256xf32, #tpu.memory_space<vmem>>, vector<64x256xf32>
      %17 = arith.subf %15, %16 : vector<64x256xf32>
      %18 = arith.mulf %17, %17 : vector<64x256xf32>
      %19 = vector.extract_strided_slice %18 {offsets = [0, 0], sizes = [8, 256], strides = [1, 1]} : vector<64x256xf32> to vector<8x256xf32>
      %20 = vector.extract_strided_slice %18 {offsets = [8, 0], sizes = [8, 256], strides = [1, 1]} : vector<64x256xf32> to vector<8x256xf32>
      %21 = arith.addf %19, %20 : vector<8x256xf32>
      %22 = vector.extract_strided_slice %18 {offsets = [16, 0], sizes = [8, 256], strides = [1, 1]} : vector<64x256xf32> to vector<8x256xf32>
      %23 = arith.addf %21, %22 : vector<8x256xf32>
      %24 = vector.extract_strided_slice %18 {offsets = [24, 0], sizes = [8, 256], strides = [1, 1]} : vector<64x256xf32> to vector<8x256xf32>
      %25 = arith.addf %23, %24 : vector<8x256xf32>
      %26 = vector.extract_strided_slice %18 {offsets = [32, 0], sizes = [8, 256], strides = [1, 1]} : vector<64x256xf32> to vector<8x256xf32>
      %27 = arith.addf %25, %26 : vector<8x256xf32>
      %28 = vector.extract_strided_slice %18 {offsets = [40, 0], sizes = [8, 256], strides = [1, 1]} : vector<64x256xf32> to vector<8x256xf32>
      %29 = arith.addf %27, %28 : vector<8x256xf32>
      %30 = vector.extract_strided_slice %18 {offsets = [48, 0], sizes = [8, 256], strides = [1, 1]} : vector<64x256xf32> to vector<8x256xf32>
      %31 = arith.addf %29, %30 : vector<8x256xf32>
      %32 = vector.extract_strided_slice %18 {offsets = [56, 0], sizes = [8, 256], strides = [1, 1]} : vector<64x256xf32> to vector<8x256xf32>
      %33 = arith.addf %31, %32 : vector<8x256xf32>
      %34 = vector.extract_strided_slice %33 {offsets = [0, 0], sizes = [8, 128], strides = [1, 1]} : vector<8x256xf32> to vector<8x128xf32>
      %35 = vector.extract_strided_slice %33 {offsets = [0, 128], sizes = [8, 128], strides = [1, 1]} : vector<8x256xf32> to vector<8x128xf32>
      %36 = arith.addf %34, %35 : vector<8x128xf32>
      %c0_15 = arith.constant 0 : index
      %c0_16 = arith.constant 0 : index
      %37 = vector.load %arg7[%c0_15, %c0_16] : memref<8x128xf32, #tpu.memory_space<vmem>>, vector<8x128xf32>
      tpu.vector_store %arg7[%c0_15, %c0_16], %36 {strides = array<i32>} : memref<8x128xf32, #tpu.memory_space<vmem>>, vector<8x128xf32>,
    } else {
    }
    return
  }
  func.func @transform_0(%arg0: i32, %arg1: i32, %arg2: i32) -> (i32, i32) {
    %c0_i32 = arith.constant 0 : i32
    return %arg0, %arg2 : i32, i32
  }
  func.func @transform_1(%arg0: i32, %arg1: i32, %arg2: i32) -> (i32, i32) {
    %c0_i32 = arith.constant 0 : i32
    return %arg2, %arg1 : i32, i32
  }
  func.func @transform_2(%arg0: i32, %arg1: i32, %arg2: i32) -> (i32, i32) {
    %c0_i32 = arith.constant 0 : i32
    %c0_i32_0 = arith.constant 0 : i32
    return %c0_i32, %arg1 : i32, i32
  }
  func.func @transform_3(%arg0: i32, %arg1: i32, %arg2: i32) -> (i32, i32) {
    %c0_i32 = arith.constant 0 : i32
    return %arg0, %arg1 : i32, i32
  }
  func.func @transform_4(%arg0: i32, %arg1: i32, %arg2: i32) -> (i32, i32) {
    %c0_i32 = arith.constant 0 : i32
    return %arg0, %arg1 : i32, i32
  }
}

</mosaic_0001>

<llo_original>
// kernel: tpu_custom_call.1
$region0: #{tpu_custom_call.1}
  #allocation0 [shape = 'u32[]', space=smem, size = 0x4, offset = 0x4, fixed_abs, tag = 'smem constant byte address 0x4 - core index']
  #allocation1 [shape = 'u32[144,128]{1,0:T(1,128)}', space=vmem, size = 0x12000, scoped, tag = 'internal scratch']
  #allocation2 [shape = 'f32[64,256]{1,0:T(8,128)}', space=vmem, size = 0x10000, scoped, tag = 'scratch operand']
  %s0 = inlined_call_operand.hbm [shape: bf16[64,1024], index: 0, kind: input, shape index: {}]
  %s1 = inlined_call_operand.hbm [shape: bf16[1024,256], index: 1, kind: input, shape index: {}]
  %s2 = inlined_call_operand.vmem [shape: f32[1,256], index: 2, kind: input, shape index: {}]
  %s3 = inlined_call_operand.hbm [shape: f32[64,256], index: 3, kind: input, shape index: {}]
  %s4 = inlined_call_operand.hbm [shape: f32[8,128], index: 4, kind: output, shape index: {}]
  %s5 = sld [smem:[#allocation0]]
  $region69: #{tpu_custom_call.1} parent=0
    _
  %s7 = ssub.s32 1, %s5
  %s8 = scalar_select 0, %s7, %s5
  $region1: #{tpu_custom_call.1} parent=0
    #allocation3 [shape = 'u8[131072]{0}', space=vmem, size = 0x20000, scoped, tag = 'input window, operand 0']
    #allocation4 [shape = 's32[2]{0}', space=sflag, size = 0x8, scoped, tag = 'scoped memory for tpu_custom_call.1']
    #allocation5 [shape = 's32[2]{0}', space=sflag, size = 0x8, scoped, tag = 'scoped memory for tpu_custom_call.1']
    #allocation6 [shape = 'u8[524288]{0}', space=vmem, size = 0x80000, scoped, tag = 'input window, operand 1']
    #allocation7 [shape = 's32[2]{0}', space=sflag, size = 0x8, scoped, tag = 'scoped memory for tpu_custom_call.1']
    #allocation8 [shape = 'u8[65536]{0}', space=vmem, size = 0x10000, scoped, tag = 'input window, operand 3, single buffered']
    #allocation9 [shape = 'u8[4096]{0}', space=vmem, size = 0x1000, scoped, tag = 'output window, operand 0, single buffered']
    %9 = vsyncpa [#allocation4], 0
    %s10 = scalar_lea.sflag [#allocation4], 1
    %11 = vsyncpa %s10, 0
    %12 = vsyncpa [#allocation7], 0
    %s13 = scalar_lea.sflag [#allocation7], 1
    %14 = vsyncpa %s13, 0
    %15 = vsyncpa [#allocation5], 0
    loop: start=0, step=1, limit=4
    $region2: #{tpu_custom_call.1} parent=1 // loop_pre_header
      _
    $region3: #{tpu_custom_call.1} parent=1 // loop_header
      %s17 = sphi 0, %s21
      %p18 = scmp.ge.s32.totalorder %s17, 4
      %s24 = sphi 0, %s43
      %s25 = sphi 0, %s39
      %s26 = sphi 0, %s35
      %s27 = sphi 0, %s24
      %s28 = sphi 0, %s25
      %s29 = sphi 0, %s26
      %s30 = sphi 0, %s27
      %s31 = sphi 0, %s28
      %s32 = sphi 0, %s29
      %s48 = sphi 0, %s50
      %s51 = sphi 0, %s48
      %s52 = sphi 0, %s51
      %s68 = sphi 0, %s52
      %s76 = sphi 0, %s78
      %s79 = sphi 0, %s76
      %s80 = sphi 0, %s79
      %s96 = sphi 0, %s80
      %s102 = sphi 0, %s104
      %s105 = sphi 0, %s102
      %s106 = sphi 0, %s105
      %s122 = sphi 0, %s106
      %s130 = sphi 0, %s132
      %s133 = sphi 0, %s130
      %s134 = sphi 0, %s133
      %s150 = sphi 0, %s134
      %s158 = sphi 0, %s160
      %s161 = sphi 0, %s158
      %s162 = sphi 0, %s161
      %s178 = sphi 0, %s162
    $region4: #{tpu_custom_call.1} parent=1 // loop_header_branch
      %20 = sbr.rel (%p18) target = $region8
    $region5: #{tpu_custom_call.1} parent=1 // loop_body
      %s22 = ssub.s32 %s17, 1
      %s23 = ssub.s32 %s17, 2
      %s33 = sadd.s32 1, %s26
      %p34 = scmp.ge.s32.totalorder %s33, 2
      %s35 = scalar_select %p34, 0, %s33
      %s36 = sadd.s32 1, %s25
      %s37 = scalar_select %p34, %s36, %s25
      %p38 = scmp.ge.s32.totalorder %s37, 1
      %s39 = scalar_select %p38, 0, %s37
      %s40 = sadd.s32 1, %s24
      %s41 = scalar_select %p38, %s40, %s24
      %p42 = scmp.ge.s32.totalorder %s41, 1
      %s43 = scalar_select %p42, 0, %s41
      %s44 = ssub.s32 %s24, %s43
      %s45 = ssub.s32 %s26, %s35
      %s46 = sor.u32 %s44, %s45
      %p47 = scmp.eq.s32.totalorder %s46, 0
      %s49 = sadd.s32 %s48, 1
      %s50 = scalar_select %p47, %s48, %s49
      %p53 = pneg %p47
      %p54 = scmp.eq.s32.totalorder %s17, 1
      %p55 = por %p53, %p54
      %p56 = scmp.ne.s32.totalorder %s48, %s51
      %p57 = scmp.eq.s32.totalorder %s17, 0
      %p58 = por %p56, %p57
      %p59 = scmp.ne.s32.totalorder %s48, %s51
      %p60 = scmp.eq.s32.totalorder %s22, 1
      %p61 = por %p59, %p60
      %p62 = scmp.ne.s32.totalorder %s51, %s52
      %p63 = scmp.eq.s32.totalorder %s22, 0
      %p64 = por %p62, %p63
      %p65 = scmp.ne.s32.totalorder %s51, %s52
      %p66 = scmp.eq.s32.totalorder %s23, 1
      %p67 = por %p65, %p66
      %p69 = scmp.ne.s32.totalorder %s52, %s68
      %p70 = scmp.eq.s32.totalorder %s23, 0
      %p71 = por %p69, %p70
      %s72 = ssub.s32 %s26, %s35
      %s73 = ssub.s32 %s25, %s39
      %s74 = sor.u32 %s72, %s73
      %p75 = scmp.eq.s32.totalorder %s74, 0
      %s77 = sadd.s32 %s76, 1
      %s78 = scalar_select %p75, %s76, %s77
      %p81 = pneg %p75
      %p82 = scmp.eq.s32.totalorder %s17, 1
      %p83 = por %p81, %p82
      %p84 = scmp.ne.s32.totalorder %s76, %s79
      %p85 = scmp.eq.s32.totalorder %s17, 0
      %p86 = por %p84, %p85
      %p87 = scmp.ne.s32.totalorder %s76, %s79
      %p88 = scmp.eq.s32.totalorder %s22, 1
      %p89 = por %p87, %p88
      %p90 = scmp.ne.s32.totalorder %s79, %s80
      %p91 = scmp.eq.s32.totalorder %s22, 0
      %p92 = por %p90, %p91
      %p93 = scmp.ne.s32.totalorder %s79, %s80
      %p94 = scmp.eq.s32.totalorder %s23, 1
      %p95 = por %p93, %p94
      %p97 = scmp.ne.s32.totalorder %s80, %s96
      %p98 = scmp.eq.s32.totalorder %s23, 0
      %p99 = por %p97, %p98
      %s100 = ssub.s32 %s25, %s39
      %p101 = scmp.eq.s32.totalorder %s100, 0
      %s103 = sadd.s32 %s102, 1
      %s104 = scalar_select %p101, %s102, %s103
      %p107 = pneg %p101
      %p108 = scmp.eq.s32.totalorder %s17, 1
      %p109 = por %p107, %p108
      %p110 = scmp.ne.s32.totalorder %s102, %s105
      %p111 = scmp.eq.s32.totalorder %s17, 0
      %p112 = por %p110, %p111
      %p113 = scmp.ne.s32.totalorder %s102, %s105
      %p114 = scmp.eq.s32.totalorder %s22, 1
      %p115 = por %p113, %p114
      %p116 = scmp.ne.s32.totalorder %s105, %s106
      %p117 = scmp.eq.s32.totalorder %s22, 0
      %p118 = por %p116, %p117
      %p119 = scmp.ne.s32.totalorder %s105, %s106
      %p120 = scmp.eq.s32.totalorder %s23, 1
      %p121 = por %p119, %p120
      %p123 = scmp.ne.s32.totalorder %s106, %s122
      %p124 = scmp.eq.s32.totalorder %s23, 0
      %p125 = por %p123, %p124
      %s126 = ssub.s32 %s24, %s43
      %s127 = ssub.s32 %s25, %s39
      %s128 = sor.u32 %s126, %s127
      %p129 = scmp.eq.s32.totalorder %s128, 0
      %s131 = sadd.s32 %s130, 1
      %s132 = scalar_select %p129, %s130, %s131
      %p135 = pneg %p129
      %p136 = scmp.eq.s32.totalorder %s17, 1
      %p137 = por %p135, %p136
      %p138 = scmp.ne.s32.totalorder %s130, %s133
      %p139 = scmp.eq.s32.totalorder %s17, 0
      %p140 = por %p138, %p139
      %p141 = scmp.ne.s32.totalorder %s130, %s133
      %p142 = scmp.eq.s32.totalorder %s22, 1
      %p143 = por %p141, %p142
      %p144 = scmp.ne.s32.totalorder %s133, %s134
      %p145 = scmp.eq.s32.totalorder %s22, 0
      %p146 = por %p144, %p145
      %p147 = scmp.ne.s32.totalorder %s133, %s134
      %p148 = scmp.eq.s32.totalorder %s23, 1
      %p149 = por %p147, %p148
      %p151 = scmp.ne.s32.totalorder %s134, %s150
      %p152 = scmp.eq.s32.totalorder %s23, 0
      %p153 = por %p151, %p152
      %s154 = ssub.s32 %s24, %s43
      %s155 = ssub.s32 %s25, %s39
      %s156 = sor.u32 %s154, %s155
      %p157 = scmp.eq.s32.totalorder %s156, 0
      %s159 = sadd.s32 %s158, 1
      %s160 = scalar_select %p157, %s158, %s159
      %p163 = pneg %p157
      %p164 = scmp.eq.s32.totalorder %s17, 1
      %p165 = por %p163, %p164
      %p166 = scmp.ne.s32.totalorder %s158, %s161
      %p167 = scmp.eq.s32.totalorder %s17, 0
      %p168 = por %p166, %p167
      %p169 = scmp.ne.s32.totalorder %s158, %s161
      %p170 = scmp.eq.s32.totalorder %s22, 1
      %p171 = por %p169, %p170
      %p172 = scmp.ne.s32.totalorder %s161, %s162
      %p173 = scmp.eq.s32.totalorder %s22, 0
      %p174 = por %p172, %p173
      %p175 = scmp.ne.s32.totalorder %s161, %s162
      %p176 = scmp.eq.s32.totalorder %s23, 1
      %p177 = por %p175, %p176
      %p179 = scmp.ne.s32.totalorder %s162, %s178
      %p180 = scmp.eq.s32.totalorder %s23, 0
      %p181 = por %p179, %p180
      %p182 = scmp.le.s32.totalorder 1, %s17
      %p183 = scmp.lt.s32.totalorder %s17, 3
      %p184 = pnand %p182, %p183
      %p185 = pneg %p184
      // Predicated region
      $region9: #{tpu_custom_call.1} parent=5 // pred_check
        _
      $region10: #{tpu_custom_call.1} parent=5 // pred_check_branch
        %187 = sbr.rel (%p184) target = $region12
      $region11: #{tpu_custom_call.1} parent=5 // pred_region
        %s188 = ssub.s32 %s17, 1
        // Predicated region
        $region13: #{tpu_custom_call.1} parent=11 // pred_check
          %p189 = pneg %p118
        $region14: #{tpu_custom_call.1} parent=11 // pred_check_branch
          %191 = sbr.rel (%p189) target = $region16
        $region15: #{tpu_custom_call.1} parent=11 // pred_region
          %s192 = smul.u32 2, %s28
          %p193 = scmp.lt.s32.totalorder %s192, 1
          %s194 = scalar_select %p193, %s192, 1
          %s195 = scalar_lea.vmem %s2, %s194
          %s196 = smul.u32 2, %s28
        $region16: #{tpu_custom_call.1} parent=11 // pred_fallthru
          _
        // Predicated region
        $region17: #{tpu_custom_call.1} parent=11 // pred_check
          %p197 = pneg %p146
        $region18: #{tpu_custom_call.1} parent=11 // pred_check_branch
          %199 = sbr.rel (%p197) target = $region20
        $region19: #{tpu_custom_call.1} parent=11 // pred_region
          %s200 = smul.u32 8, %s27
          %s201 = smul.u32 2, %s28
          %s203 = ssub.s32 2048, 2048
          %204 = vsyncadd [#allocation7], %s203
          %s205 = smul.addr %s200, 2
          %s206 = sadd.s32 %s201, %s205
          %s207 = smul.addr %s206, 128
          %s208 = scalar_lea.hbm %s3, %s207
          %s209 = sshll.u32 [#allocation8], 4
          %s210 = int_to_ptr.vmem [resolvable:$true] %s209
          %215 = dma.hbm_to_vmem [thread:$0]  %s208, 2048, %s210, [#allocation7], 256, 256, 16
        $region20: #{tpu_custom_call.1} parent=11 // pred_fallthru
          _
      $region12: #{tpu_custom_call.1} parent=5 // pred_fallthru
        _
      %p216 = scmp.lt.s32.totalorder %s17, 2
      // Predicated region
      $region21: #{tpu_custom_call.1} parent=5 // pred_check
        %p217 = pneg %p216
      $region22: #{tpu_custom_call.1} parent=5 // pred_check_branch
        %219 = sbr.rel (%p217) target = $region24
      $region23: #{tpu_custom_call.1} parent=5 // pred_region
        // Predicated region
        $region25: #{tpu_custom_call.1} parent=23 // pred_check
          %p220 = pneg %p58
        $region26: #{tpu_custom_call.1} parent=23 // pred_check_branch
          %222 = sbr.rel (%p220) target = $region28
        $region27: #{tpu_custom_call.1} parent=23 // pred_region
          %s223 = sand.u32 %s48, 1
          %s224 = scalar_lea.sflag [#allocation4], %s223
          %s225 = sand.u32 %s48, 1
          %s226 = smul.addr %s225, 128
          %s227 = scalar_lea.vmem [#allocation3], %s226
          %s228 = smul.u32 8, %s24
          %s229 = smul.u32 4, %s26
          %s231 = ssub.s32 2048, 2048
          %232 = vsyncadd %s224, %s231
          %s233 = smul.addr %s228, 8
          %s234 = sadd.s32 %s229, %s233
          %s235 = smul.addr %s234, 64
          %s236 = scalar_lea.hbm %s0, %s235
          %s237 = sshll.u32 %s227, 4
          %s238 = int_to_ptr.vmem [resolvable:$true] %s237
          %243 = dma.hbm_to_vmem [thread:$0]  %s236, 2048, %s238, %s224, 512, 256, 16
        $region28: #{tpu_custom_call.1} parent=23 // pred_fallthru
          _
        // Predicated region
        $region29: #{tpu_custom_call.1} parent=23 // pred_check
          %p244 = pneg %p86
        $region30: #{tpu_custom_call.1} parent=23 // pred_check_branch
          %246 = sbr.rel (%p244) target = $region32
        $region31: #{tpu_custom_call.1} parent=23 // pred_region
          %s247 = sand.u32 %s17, 1
          %s248 = scalar_lea.sflag [#allocation7], %s247
          %s249 = sand.u32 %s76, 1
          %s250 = smul.addr %s249, 512
          %s251 = scalar_lea.vmem [#allocation6], %s250
          %s252 = smul.u32 64, %s26
          %s253 = smul.u32 2, %s25
          %s255 = ssub.s32 8192, 8192
          %256 = vsyncadd %s248, %s255
          %s257 = smul.addr %s252, 2
          %s258 = sadd.s32 %s253, %s257
          %s259 = smul.addr %s258, 64
          %s260 = scalar_lea.hbm %s1, %s259
          %s261 = sshll.u32 %s251, 4
          %s262 = int_to_ptr.vmem [resolvable:$true] %s261
          %267 = dma.hbm_to_vmem [thread:$0]  %s260, 8192, %s262, %s248, 128, 128, 8
        $region32: #{tpu_custom_call.1} parent=23 // pred_fallthru
          _
      $region24: #{tpu_custom_call.1} parent=5 // pred_fallthru
        _
      %p268 = scmp.le.s32.totalorder 1, %s17
      %p269 = scmp.lt.s32.totalorder %s17, 3
      %p270 = pnand %p268, %p269
      %p271 = pneg %p270
      // Predicated region
      $region33: #{tpu_custom_call.1} parent=5 // pred_check
        _
      $region34: #{tpu_custom_call.1} parent=5 // pred_check_branch
        %273 = sbr.rel (%p270) target = $region36
      $region35: #{tpu_custom_call.1} parent=5 // pred_region
        %s274 = ssub.s32 %s17, 1
        %s275 = sand.u32 %s51, 1
        %s276 = scalar_lea.sflag [#allocation4], %s275
        %s277 = sand.u32 %s51, 1
        %s278 = smul.addr %s277, 128
        %s279 = scalar_lea.vmem [#allocation3], %s278
        // Predicated region
        $region37: #{tpu_custom_call.1} parent=35 // pred_check
          %p280 = pneg %p64
        $region38: #{tpu_custom_call.1} parent=35 // pred_check_branch
          %282 = sbr.rel (%p280) target = $region40
        $region39: #{tpu_custom_call.1} parent=35 // pred_region
          %283 = dma.done %s276, 2048
        $region40: #{tpu_custom_call.1} parent=35 // pred_fallthru
          _
        %s284 = sand.u32 %s22, 1
        %s285 = scalar_lea.sflag [#allocation7], %s284
        %s286 = sand.u32 %s79, 1
        %s287 = smul.addr %s286, 512
        %s288 = scalar_lea.vmem [#allocation6], %s287
        // Predicated region
        $region41: #{tpu_custom_call.1} parent=35 // pred_check
          %p289 = pneg %p92
        $region42: #{tpu_custom_call.1} parent=35 // pred_check_branch
          %291 = sbr.rel (%p289) target = $region44
        $region43: #{tpu_custom_call.1} parent=35 // pred_region
          %292 = dma.done %s285, 8192
        $region44: #{tpu_custom_call.1} parent=35 // pred_fallthru
          _
        // Predicated region
        $region45: #{tpu_custom_call.1} parent=35 // pred_check
          %p293 = pneg %p146
        $region46: #{tpu_custom_call.1} parent=35 // pred_check_branch
          %295 = sbr.rel (%p293) target = $region48
        $region47: #{tpu_custom_call.1} parent=35 // pred_region
          %296 = dma.done [#allocation7], 2048
        $region48: #{tpu_custom_call.1} parent=35 // pred_fallthru
          _
        %s297 = sand.u32 %s51, 1
        %s298 = scalar_lea.sflag [#allocation4], %s297
        %s299 = sand.u32 %s51, 1
        %s300 = smul.addr %s299, 128
        %s301 = scalar_lea.vmem [#allocation3], %s300
        %p302 = pneg %p64
        %p303 = pneg %p61
        %s304 = sand.u32 %s22, 1
        %s305 = scalar_lea.sflag [#allocation7], %s304
        %s306 = sand.u32 %s79, 1
        %s307 = smul.addr %s306, 512
        %s308 = scalar_lea.vmem [#allocation6], %s307
        %p309 = pneg %p92
        %p310 = pneg %p89
        %s311 = smul.u32 2, %s28
        %p312 = scmp.lt.s32.totalorder %s311, 1
        %s313 = scalar_select %p312, %s311, 1
        %s314 = scalar_lea.vmem %s2, %s313
        %p315 = pneg %p118
        %p316 = pneg %p115
        %p317 = pneg %p146
        %p318 = pneg %p143
        %p319 = pneg %p174
        %p320 = pneg %p171
        %s321 = smul.u32 8, %s27
        %s322 = smul.u32 4, %s29
        %s323 = smul.u32 64, %s29
        %s324 = smul.u32 2, %s28
        %s325 = smul.u32 2, %s28
        %p326 = scmp.lt.s32.totalorder %s325, 1
        %s327 = scalar_select %p326, %s325, 1
        %s328 = scalar_lea.vmem %s2, %s327
        %s329 = smul.u32 2, %s28
        %s330 = smul.u32 8, %s27
        %s331 = smul.u32 2, %s28
        %p332 = scmp.eq.s32.totalorder %s29, 0
        // Predicated region
        $region49: #{tpu_custom_call.1} parent=35 // pred_check
          %p333 = pneg %p332
        $region50: #{tpu_custom_call.1} parent=35 // pred_check_branch
          %335 = sbr.rel (%p333) target = $region52
        $region51: #{tpu_custom_call.1} parent=35 // pred_region
          %336 = vst [vmem:[#allocation2] sm:$0xff] 0.0
          %337 = vst [vmem:[#allocation2 + $0x8] sm:$0xff] 0.0
          %338 = vst [vmem:[#allocation2 + $0x10] sm:$0xff] 0.0
          %339 = vst [vmem:[#allocation2 + $0x18] sm:$0xff] 0.0
          %340 = vst [vmem:[#allocation2 + $0x20] sm:$0xff] 0.0
          %341 = vst [vmem:[#allocation2 + $0x28] sm:$0xff] 0.0
          %342 = vst [vmem:[#allocation2 + $0x30] sm:$0xff] 0.0
          %343 = vst [vmem:[#allocation2 + $0x38] sm:$0xff] 0.0
          %344 = vst [vmem:[#allocation2 + $0x40] sm:$0xff] 0.0
          %345 = vst [vmem:[#allocation2 + $0x48] sm:$0xff] 0.0
          %346 = vst [vmem:[#allocation2 + $0x50] sm:$0xff] 0.0
          %347 = vst [vmem:[#allocation2 + $0x58] sm:$0xff] 0.0
          %348 = vst [vmem:[#allocation2 + $0x60] sm:$0xff] 0.0
          %349 = vst [vmem:[#allocation2 + $0x68] sm:$0xff] 0.0
          %350 = vst [vmem:[#allocation2 + $0x70] sm:$0xff] 0.0
          %351 = vst [vmem:[#allocation2 + $0x78] sm:$0xff] 0.0
        $region52: #{tpu_custom_call.1} parent=35 // pred_fallthru
          _
        %v352 = vld [vmem:[#allocation2] sm:$0xff]
        %v353 = vld [vmem:[#allocation2 + $0x8] sm:$0xff]
        %v354 = vld [vmem:[#allocation2 + $0x10] sm:$0xff]
        %v355 = vld [vmem:[#allocation2 + $0x18] sm:$0xff]
        %v356 = vld [vmem:[#allocation2 + $0x20] sm:$0xff]
        %v357 = vld [vmem:[#allocation2 + $0x28] sm:$0xff]
        %v358 = vld [vmem:[#allocation2 + $0x30] sm:$0xff]
        %v359 = vld [vmem:[#allocation2 + $0x38] sm:$0xff]
        %v360 = vld [vmem:[#allocation2 + $0x40] sm:$0xff]
        %v361 = vld [vmem:[#allocation2 + $0x48] sm:$0xff]
        %v362 = vld [vmem:[#allocation2 + $0x50] sm:$0xff]
        %v363 = vld [vmem:[#allocation2 + $0x58] sm:$0xff]
        %v364 = vld [vmem:[#allocation2 + $0x60] sm:$0xff]
        %v365 = vld [vmem:[#allocation2 + $0x68] sm:$0xff]
        %v366 = vld [vmem:[#allocation2 + $0x70] sm:$0xff]
        %v367 = vld [vmem:[#allocation2 + $0x78] sm:$0xff]
        %v368 = vld [vmem:[%s279] sm:$0xff]
        %v369 = vld [vmem:[%s279 + $0x8] sm:$0xff]
        %v370 = vld [vmem:[%s279 + $0x10] sm:$0xff]
        %v371 = vld [vmem:[%s279 + $0x18] sm:$0xff]
        %v372 = vld [vmem:[%s279 + $0x20] sm:$0xff]
        %v373 = vld [vmem:[%s279 + $0x28] sm:$0xff]
        %v374 = vld [vmem:[%s279 + $0x30] sm:$0xff]
        %v375 = vld [vmem:[%s279 + $0x38] sm:$0xff]
        %v376 = vld [vmem:[%s279 + $0x40] sm:$0xff]
        %v377 = vld [vmem:[%s279 + $0x48] sm:$0xff]
        %v378 = vld [vmem:[%s279 + $0x50] sm:$0xff]
        %v379 = vld [vmem:[%s279 + $0x58] sm:$0xff]
        %v380 = vld [vmem:[%s279 + $0x60] sm:$0xff]
        %v381 = vld [vmem:[%s279 + $0x68] sm:$0xff]
        %v382 = vld [vmem:[%s279 + $0x70] sm:$0xff]
        %v383 = vld [vmem:[%s279 + $0x78] sm:$0xff]
        %v384 = vld [vmem:[%s288] sm:$0xff]
        %v385 = vld [vmem:[%s288 + $0x8] sm:$0xff]
        %v386 = vld [vmem:[%s288 + $0x10] sm:$0xff]
        %v387 = vld [vmem:[%s288 + $0x18] sm:$0xff]
        %v388 = vld [vmem:[%s288 + $0x20] sm:$0xff]
        %v389 = vld [vmem:[%s288 + $0x28] sm:$0xff]
        %v390 = vld [vmem:[%s288 + $0x30] sm:$0xff]
        %v391 = vld [vmem:[%s288 + $0x38] sm:$0xff]
        %v392 = vld [vmem:[%s288 + $0x40] sm:$0xff]
        %v393 = vld [vmem:[%s288 + $0x48] sm:$0xff]
        %v394 = vld [vmem:[%s288 + $0x50] sm:$0xff]
        %v395 = vld [vmem:[%s288 + $0x58] sm:$0xff]
        %v396 = vld [vmem:[%s288 + $0x60] sm:$0xff]
        %v397 = vld [vmem:[%s288 + $0x68] sm:$0xff]
        %v398 = vld [vmem:[%s288 + $0x70] sm:$0xff]
        %v399 = vld [vmem:[%s288 + $0x78] sm:$0xff]
        %v400 = vld [vmem:[%s288 + $0x80] sm:$0xff]
        %v401 = vld [vmem:[%s288 + $0x88] sm:$0xff]
        %v402 = vld [vmem:[%s288 + $0x90] sm:$0xff]
        %v403 = vld [vmem:[%s288 + $0x98] sm:$0xff]
        %v404 = vld [vmem:[%s288 + $0xa0] sm:$0xff]
        %v405 = vld [vmem:[%s288 + $0xa8] sm:$0xff]
        %v406 = vld [vmem:[%s288 + $0xb0] sm:$0xff]
        %v407 = vld [vmem:[%s288 + $0xb8] sm:$0xff]
        %v408 = vld [vmem:[%s288 + $0xc0] sm:$0xff]
        %v409 = vld [vmem:[%s288 + $0xc8] sm:$0xff]
        %v410 = vld [vmem:[%s288 + $0xd0] sm:$0xff]
        %v411 = vld [vmem:[%s288 + $0xd8] sm:$0xff]
        %v412 = vld [vmem:[%s288 + $0xe0] sm:$0xff]
        %v413 = vld [vmem:[%s288 + $0xe8] sm:$0xff]
        %v414 = vld [vmem:[%s288 + $0xf0] sm:$0xff]
        %v415 = vld [vmem:[%s288 + $0xf8] sm:$0xff]
        %v416 = vld [vmem:[%s288 + $0x100] sm:$0xff]
        %v417 = vld [vmem:[%s288 + $0x108] sm:$0xff]
        %v418 = vld [vmem:[%s288 + $0x110] sm:$0xff]
        %v419 = vld [vmem:[%s288 + $0x118] sm:$0xff]
        %v420 = vld [vmem:[%s288 + $0x120] sm:$0xff]
        %v421 = vld [vmem:[%s288 + $0x128] sm:$0xff]
        %v422 = vld [vmem:[%s288 + $0x130] sm:$0xff]
        %v423 = vld [vmem:[%s288 + $0x138] sm:$0xff]
        %v424 = vld [vmem:[%s288 + $0x140] sm:$0xff]
        %v425 = vld [vmem:[%s288 + $0x148] sm:$0xff]
        %v426 = vld [vmem:[%s288 + $0x150] sm:$0xff]
        %v427 = vld [vmem:[%s288 + $0x158] sm:$0xff]
        %v428 = vld [vmem:[%s288 + $0x160] sm:$0xff]
        %v429 = vld [vmem:[%s288 + $0x168] sm:$0xff]
        %v430 = vld [vmem:[%s288 + $0x170] sm:$0xff]
        %v431 = vld [vmem:[%s288 + $0x178] sm:$0xff]
        %v432 = vld [vmem:[%s288 + $0x180] sm:$0xff]
        %v433 = vld [vmem:[%s288 + $0x188] sm:$0xff]
        %v434 = vld [vmem:[%s288 + $0x190] sm:$0xff]
        %v435 = vld [vmem:[%s288 + $0x198] sm:$0xff]
        %v436 = vld [vmem:[%s288 + $0x1a0] sm:$0xff]
        %v437 = vld [vmem:[%s288 + $0x1a8] sm:$0xff]
        %v438 = vld [vmem:[%s288 + $0x1b0] sm:$0xff]
        %v439 = vld [vmem:[%s288 + $0x1b8] sm:$0xff]
        %v440 = vld [vmem:[%s288 + $0x1c0] sm:$0xff]
        %v441 = vld [vmem:[%s288 + $0x1c8] sm:$0xff]
        %v442 = vld [vmem:[%s288 + $0x1d0] sm:$0xff]
        %v443 = vld [vmem:[%s288 + $0x1d8] sm:$0xff]
        %v444 = vld [vmem:[%s288 + $0x1e0] sm:$0xff]
        %v445 = vld [vmem:[%s288 + $0x1e8] sm:$0xff]
        %v446 = vld [vmem:[%s288 + $0x1f0] sm:$0xff]
        %v447 = vld [vmem:[%s288 + $0x1f8] sm:$0xff]
        %v464 = vunpack.c.l.b16 %v368
        %v465 = vunpack.c.h.b16 %v368
        %v466 = vunpack.c.l.b16 %v369
        %v467 = vunpack.c.h.b16 %v369
        %v468 = vunpack.c.l.b16 %v370
        %v469 = vunpack.c.h.b16 %v370
        %v470 = vunpack.c.l.b16 %v371
        %v471 = vunpack.c.h.b16 %v371
        %v472 = vunpack.c.l.b16 %v372
        %v473 = vunpack.c.h.b16 %v372
        %v474 = vunpack.c.l.b16 %v373
        %v475 = vunpack.c.h.b16 %v373
        %v476 = vunpack.c.l.b16 %v374
        %v477 = vunpack.c.h.b16 %v374
        %v478 = vunpack.c.l.b16 %v375
        %v479 = vunpack.c.h.b16 %v375
        %v480 = vunpack.c.l.b16 %v376
        %v481 = vunpack.c.h.b16 %v376
        %v482 = vunpack.c.l.b16 %v377
        %v483 = vunpack.c.h.b16 %v377
        %v484 = vunpack.c.l.b16 %v378
        %v485 = vunpack.c.h.b16 %v378
        %v486 = vunpack.c.l.b16 %v379
        %v487 = vunpack.c.h.b16 %v379
        %v488 = vunpack.c.l.b16 %v380
        %v489 = vunpack.c.h.b16 %v380
        %v490 = vunpack.c.l.b16 %v381
        %v491 = vunpack.c.h.b16 %v381
        %v492 = vunpack.c.l.b16 %v382
        %v493 = vunpack.c.h.b16 %v382
        %v494 = vunpack.c.l.b16 %v383
        %v495 = vunpack.c.h.b16 %v383
        %v496 = vpack.c.b16 %v468, %v464
        %v497 = vpack.c.b16 %v469, %v465
        %v498 = vpack.c.b16 %v470, %v466
        %v499 = vpack.c.b16 %v471, %v467
        %v500 = vpack.c.b16 %v476, %v472
        %v501 = vpack.c.b16 %v477, %v473
        %v502 = vpack.c.b16 %v478, %v474
        %v503 = vpack.c.b16 %v479, %v475
        %v504 = vpack.c.b16 %v484, %v480
        %v505 = vpack.c.b16 %v485, %v481
        %v506 = vpack.c.b16 %v486, %v482
        %v507 = vpack.c.b16 %v487, %v483
        %v508 = vpack.c.b16 %v492, %v488
        %v509 = vpack.c.b16 %v493, %v489
        %v510 = vpack.c.b16 %v494, %v490
        %v511 = vpack.c.b16 %v495, %v491
        %v592 = vunpack.c.l.b16 %v384
        %v593 = vunpack.c.h.b16 %v384
        %v594 = vunpack.c.l.b16 %v385
        %v595 = vunpack.c.h.b16 %v385
        %v596 = vunpack.c.l.b16 %v386
        %v597 = vunpack.c.h.b16 %v386
        %v598 = vunpack.c.l.b16 %v387
        %v599 = vunpack.c.h.b16 %v387
        %v600 = vunpack.c.l.b16 %v388
        %v601 = vunpack.c.h.b16 %v388
        %v602 = vunpack.c.l.b16 %v389
        %v603 = vunpack.c.h.b16 %v389
        %v604 = vunpack.c.l.b16 %v390
        %v605 = vunpack.c.h.b16 %v390
        %v606 = vunpack.c.l.b16 %v391
        %v607 = vunpack.c.h.b16 %v391
        %v608 = vunpack.c.l.b16 %v392
        %v609 = vunpack.c.h.b16 %v392
        %v610 = vunpack.c.l.b16 %v393
        %v611 = vunpack.c.h.b16 %v393
        %v612 = vunpack.c.l.b16 %v394
        %v613 = vunpack.c.h.b16 %v394
        %v614 = vunpack.c.l.b16 %v395
        %v615 = vunpack.c.h.b16 %v395
        %v616 = vunpack.c.l.b16 %v396
        %v617 = vunpack.c.h.b16 %v396
        %v618 = vunpack.c.l.b16 %v397
        %v619 = vunpack.c.h.b16 %v397
        %v620 = vunpack.c.l.b16 %v398
        %v621 = vunpack.c.h.b16 %v398
        %v622 = vunpack.c.l.b16 %v399
        %v623 = vunpack.c.h.b16 %v399
        %v624 = vunpack.c.l.b16 %v400
        %v625 = vunpack.c.h.b16 %v400
        %v626 = vunpack.c.l.b16 %v401
        %v627 = vunpack.c.h.b16 %v401
        %v628 = vunpack.c.l.b16 %v402
        %v629 = vunpack.c.h.b16 %v402
        %v630 = vunpack.c.l.b16 %v403
        %v631 = vunpack.c.h.b16 %v403
        %v632 = vunpack.c.l.b16 %v404
        %v633 = vunpack.c.h.b16 %v404
        %v634 = vunpack.c.l.b16 %v405
        %v635 = vunpack.c.h.b16 %v405
        %v636 = vunpack.c.l.b16 %v406
        %v637 = vunpack.c.h.b16 %v406
        %v638 = vunpack.c.l.b16 %v407
        %v639 = vunpack.c.h.b16 %v407
        %v640 = vunpack.c.l.b16 %v408
        %v641 = vunpack.c.h.b16 %v408
        %v642 = vunpack.c.l.b16 %v409
        %v643 = vunpack.c.h.b16 %v409
        %v644 = vunpack.c.l.b16 %v410
        %v645 = vunpack.c.h.b16 %v410
        %v646 = vunpack.c.l.b16 %v411
        %v647 = vunpack.c.h.b16 %v411
        %v648 = vunpack.c.l.b16 %v412
        %v649 = vunpack.c.h.b16 %v412
        %v650 = vunpack.c.l.b16 %v413
        %v651 = vunpack.c.h.b16 %v413
        %v652 = vunpack.c.l.b16 %v414
        %v653 = vunpack.c.h.b16 %v414
        %v654 = vunpack.c.l.b16 %v415
        %v655 = vunpack.c.h.b16 %v415
        %v656 = vunpack.c.l.b16 %v416
        %v657 = vunpack.c.h.b16 %v416
        %v658 = vunpack.c.l.b16 %v417
        %v659 = vunpack.c.h.b16 %v417
        %v660 = vunpack.c.l.b16 %v418
        %v661 = vunpack.c.h.b16 %v418
        %v662 = vunpack.c.l.b16 %v419
        %v663 = vunpack.c.h.b16 %v419
        %v664 = vunpack.c.l.b16 %v420
        %v665 = vunpack.c.h.b16 %v420
        %v666 = vunpack.c.l.b16 %v421
        %v667 = vunpack.c.h.b16 %v421
        %v668 = vunpack.c.l.b16 %v422
        %v669 = vunpack.c.h.b16 %v422
        %v670 = vunpack.c.l.b16 %v423
        %v671 = vunpack.c.h.b16 %v423
        %v672 = vunpack.c.l.b16 %v424
        %v673 = vunpack.c.h.b16 %v424
        %v674 = vunpack.c.l.b16 %v425
        %v675 = vunpack.c.h.b16 %v425
        %v676 = vunpack.c.l.b16 %v426
        %v677 = vunpack.c.h.b16 %v426
        %v678 = vunpack.c.l.b16 %v427
        %v679 = vunpack.c.h.b16 %v427
        %v680 = vunpack.c.l.b16 %v428
        %v681 = vunpack.c.h.b16 %v428
        %v682 = vunpack.c.l.b16 %v429
        %v683 = vunpack.c.h.b16 %v429
        %v684 = vunpack.c.l.b16 %v430
        %v685 = vunpack.c.h.b16 %v430
        %v686 = vunpack.c.l.b16 %v431
        %v687 = vunpack.c.h.b16 %v431
        %v688 = vunpack.c.l.b16 %v432
        %v689 = vunpack.c.h.b16 %v432
        %v690 = vunpack.c.l.b16 %v433
        %v691 = vunpack.c.h.b16 %v433
        %v692 = vunpack.c.l.b16 %v434
        %v693 = vunpack.c.h.b16 %v434
        %v694 = vunpack.c.l.b16 %v435
        %v695 = vunpack.c.h.b16 %v435
        %v696 = vunpack.c.l.b16 %v436
        %v697 = vunpack.c.h.b16 %v436
        %v698 = vunpack.c.l.b16 %v437
        %v699 = vunpack.c.h.b16 %v437
        %v700 = vunpack.c.l.b16 %v438
        %v701 = vunpack.c.h.b16 %v438
        %v702 = vunpack.c.l.b16 %v439
        %v703 = vunpack.c.h.b16 %v439
        %v704 = vunpack.c.l.b16 %v440
        %v705 = vunpack.c.h.b16 %v440
        %v706 = vunpack.c.l.b16 %v441
        %v707 = vunpack.c.h.b16 %v441
        %v708 = vunpack.c.l.b16 %v442
        %v709 = vunpack.c.h.b16 %v442
        %v710 = vunpack.c.l.b16 %v443
        %v711 = vunpack.c.h.b16 %v443
        %v712 = vunpack.c.l.b16 %v444
        %v713 = vunpack.c.h.b16 %v444
        %v714 = vunpack.c.l.b16 %v445
        %v715 = vunpack.c.h.b16 %v445
        %v716 = vunpack.c.l.b16 %v446
        %v717 = vunpack.c.h.b16 %v446
        %v718 = vunpack.c.l.b16 %v447
        %v719 = vunpack.c.h.b16 %v447
        %v720 = vpack.c.b16 %v594, %v592
        %v721 = vpack.c.b16 %v595, %v593
        %v722 = vpack.c.b16 %v598, %v596
        %v723 = vpack.c.b16 %v599, %v597
        %v724 = vpack.c.b16 %v602, %v600
        %v725 = vpack.c.b16 %v603, %v601
        %v726 = vpack.c.b16 %v606, %v604
        %v727 = vpack.c.b16 %v607, %v605
        %v728 = vpack.c.b16 %v610, %v608
        %v729 = vpack.c.b16 %v611, %v609
        %v730 = vpack.c.b16 %v614, %v612
        %v731 = vpack.c.b16 %v615, %v613
        %v732 = vpack.c.b16 %v618, %v616
        %v733 = vpack.c.b16 %v619, %v617
        %v734 = vpack.c.b16 %v622, %v620
        %v735 = vpack.c.b16 %v623, %v621
        %v736 = vpack.c.b16 %v626, %v624
        %v737 = vpack.c.b16 %v627, %v625
        %v738 = vpack.c.b16 %v630, %v628
        %v739 = vpack.c.b16 %v631, %v629
        %v740 = vpack.c.b16 %v634, %v632
        %v741 = vpack.c.b16 %v635, %v633
        %v742 = vpack.c.b16 %v638, %v636
        %v743 = vpack.c.b16 %v639, %v637
        %v744 = vpack.c.b16 %v642, %v640
        %v745 = vpack.c.b16 %v643, %v641
        %v746 = vpack.c.b16 %v646, %v644
        %v747 = vpack.c.b16 %v647, %v645
        %v748 = vpack.c.b16 %v650, %v648
        %v749 = vpack.c.b16 %v651, %v649
        %v750 = vpack.c.b16 %v654, %v652
        %v751 = vpack.c.b16 %v655, %v653
        %v752 = vpack.c.b16 %v658, %v656
        %v753 = vpack.c.b16 %v659, %v657
        %v754 = vpack.c.b16 %v662, %v660
        %v755 = vpack.c.b16 %v663, %v661
        %v756 = vpack.c.b16 %v666, %v664
        %v757 = vpack.c.b16 %v667, %v665
        %v758 = vpack.c.b16 %v670, %v668
        %v759 = vpack.c.b16 %v671, %v669
        %v760 = vpack.c.b16 %v674, %v672
        %v761 = vpack.c.b16 %v675, %v673
        %v762 = vpack.c.b16 %v678, %v676
        %v763 = vpack.c.b16 %v679, %v677
        %v764 = vpack.c.b16 %v682, %v680
        %v765 = vpack.c.b16 %v683, %v681
        %v766 = vpack.c.b16 %v686, %v684
        %v767 = vpack.c.b16 %v687, %v685
        %v768 = vpack.c.b16 %v690, %v688
        %v769 = vpack.c.b16 %v691, %v689
        %v770 = vpack.c.b16 %v694, %v692
        %v771 = vpack.c.b16 %v695, %v693
        %v772 = vpack.c.b16 %v698, %v696
        %v773 = vpack.c.b16 %v699, %v697
        %v774 = vpack.c.b16 %v702, %v700
        %v775 = vpack.c.b16 %v703, %v701
        %v776 = vpack.c.b16 %v706, %v704
        %v777 = vpack.c.b16 %v707, %v705
        %v778 = vpack.c.b16 %v710, %v708
        %v779 = vpack.c.b16 %v711, %v709
        %v780 = vpack.c.b16 %v714, %v712
        %v781 = vpack.c.b16 %v715, %v713
        %v782 = vpack.c.b16 %v718, %v716
        %v783 = vpack.c.b16 %v719, %v717
        %848 = vmatprep.subr.bf16.mxu0 %v721
        %849 = vmatpush1.bf16.msra.mxu0 %v720
        %850 = vmatprep.subr.bf16.mxu0 %v723
        %851 = vmatpush1.bf16.msra.mxu0 %v722
        %852 = vmatprep.subr.bf16.mxu0 %v725
        %853 = vmatpush1.bf16.msra.mxu0 %v724
        %854 = vmatprep.subr.bf16.mxu0 %v727
        %855 = vmatpush1.bf16.msra.mxu0 %v726
        %856 = vmatprep.subr.bf16.mxu0 %v729
        %857 = vmatpush1.bf16.msra.mxu0 %v728
        %858 = vmatprep.subr.bf16.mxu0 %v731
        %859 = vmatpush1.bf16.msra.mxu0 %v730
        %860 = vmatprep.subr.bf16.mxu0 %v733
        %861 = vmatpush1.bf16.msra.mxu0 %v732
        %862 = vmatprep.subr.bf16.mxu0 %v735
        %863 = vmatpush1.bf16.msra.mxu0 %v734
        %864 = vmatprep.subr.bf16.mxu0 %v737
        %865 = vmatpush1.bf16.msra.mxu0 %v736
        %866 = vmatprep.subr.bf16.mxu0 %v739
        %867 = vmatpush1.bf16.msra.mxu0 %v738
        %868 = vmatprep.subr.bf16.mxu0 %v741
        %869 = vmatpush1.bf16.msra.mxu0 %v740
        %870 = vmatprep.subr.bf16.mxu0 %v743
        %871 = vmatpush1.bf16.msra.mxu0 %v742
        %872 = vmatprep.subr.bf16.mxu0 %v745
        %873 = vmatpush1.bf16.msra.mxu0 %v744
        %874 = vmatprep.subr.bf16.mxu0 %v747
        %875 = vmatpush1.bf16.msra.mxu0 %v746
        %876 = vmatprep.subr.bf16.mxu0 %v749
        %877 = vmatpush1.bf16.msra.mxu0 %v748
        %878 = vmatprep.subr.bf16.mxu0 %v751
        %879 = vmatpush1.bf16.msra.mxu0 %v750
        %880 = vmatprep.mubr.bf16.mxu0 %v497
        %881 = vmatmul.mubr.bf16.gmra.mrb[0].mxu0 %v496
        %v882 = vpop.f32.mrb[0].mxu0
        %v883 = vadd.f32 0.0, %v882
        %v884 = vpop.f32.mrb[0].mxu0
        %v885 = vadd.f32 0.0, %v884
        %v886 = vpop.f32.mrb[0].mxu0
        %v887 = vadd.f32 0.0, %v886
        %v888 = vpop.f32.mrb[0].mxu0
        %v889 = vadd.f32 0.0, %v888
        %890 = vmatprep.mubr.bf16.mxu0 %v501
        %891 = vmatmul.mubr.bf16.gmra.mrb[0].mxu0 %v500
        %v892 = vpop.f32.mrb[0].mxu0
        %v893 = vadd.f32 0.0, %v892
        %v894 = vpop.f32.mrb[0].mxu0
        %v895 = vadd.f32 0.0, %v894
        %v896 = vpop.f32.mrb[0].mxu0
        %v897 = vadd.f32 0.0, %v896
        %v898 = vpop.f32.mrb[0].mxu0
        %v899 = vadd.f32 0.0, %v898
        %900 = vmatprep.mubr.bf16.mxu0 %v505
        %901 = vmatmul.mubr.bf16.gmra.mrb[0].mxu0 %v504
        %v902 = vpop.f32.mrb[0].mxu0
        %v903 = vadd.f32 0.0, %v902
        %v904 = vpop.f32.mrb[0].mxu0
        %v905 = vadd.f32 0.0, %v904
        %v906 = vpop.f32.mrb[0].mxu0
        %v907 = vadd.f32 0.0, %v906
        %v908 = vpop.f32.mrb[0].mxu0
        %v909 = vadd.f32 0.0, %v908
        %910 = vmatprep.mubr.bf16.mxu0 %v509
        %911 = vmatmul.mubr.bf16.gmra.mrb[0].mxu0 %v508
        %v912 = vpop.f32.mrb[0].mxu0
        %v913 = vadd.f32 0.0, %v912
        %v914 = vpop.f32.mrb[0].mxu0
        %v915 = vadd.f32 0.0, %v914
        %v916 = vpop.f32.mrb[0].mxu0
        %v917 = vadd.f32 0.0, %v916
        %v918 = vpop.f32.mrb[0].mxu0
        %v919 = vadd.f32 0.0, %v918
        %920 = vdwg.mxu0
        %921 = vmatprep.subr.bf16.mxu0 %v753
        %922 = vmatpush1.bf16.msra.mxu0 %v752
        %923 = vmatprep.subr.bf16.mxu0 %v755
        %924 = vmatpush1.bf16.msra.mxu0 %v754
        %925 = vmatprep.subr.bf16.mxu0 %v757
        %926 = vmatpush1.bf16.msra.mxu0 %v756
        %927 = vmatprep.subr.bf16.mxu0 %v759
        %928 = vmatpush1.bf16.msra.mxu0 %v758
        %929 = vmatprep.subr.bf16.mxu0 %v761
        %930 = vmatpush1.bf16.msra.mxu0 %v760
        %931 = vmatprep.subr.bf16.mxu0 %v763
        %932 = vmatpush1.bf16.msra.mxu0 %v762
        %933 = vmatprep.subr.bf16.mxu0 %v765
        %934 = vmatpush1.bf16.msra.mxu0 %v764
        %935 = vmatprep.subr.bf16.mxu0 %v767
        %936 = vmatpush1.bf16.msra.mxu0 %v766
        %937 = vmatprep.subr.bf16.mxu0 %v769
        %938 = vmatpush1.bf16.msra.mxu0 %v768
        %939 = vmatprep.subr.bf16.mxu0 %v771
        %940 = vmatpush1.bf16.msra.mxu0 %v770
        %941 = vmatprep.subr.bf16.mxu0 %v773
        %942 = vmatpush1.bf16.msra.mxu0 %v772
        %943 = vmatprep.subr.bf16.mxu0 %v775
        %944 = vmatpush1.bf16.msra.mxu0 %v774
        %945 = vmatprep.subr.bf16.mxu0 %v777
        %946 = vmatpush1.bf16.msra.mxu0 %v776
        %947 = vmatprep.subr.bf16.mxu0 %v779
        %948 = vmatpush1.bf16.msra.mxu0 %v778
        %949 = vmatprep.subr.bf16.mxu0 %v781
        %950 = vmatpush1.bf16.msra.mxu0 %v780
        %951 = vmatprep.subr.bf16.mxu0 %v783
        %952 = vmatpush1.bf16.msra.mxu0 %v782
        %953 = vmatprep.mubr.bf16.mxu0 %v499
        %954 = vmatmul.mubr.bf16.gmra.mrb[0].mxu0 %v498
        %v955 = vpop.f32.mrb[0].mxu0
        %v956 = vadd.f32 %v883, %v955
        %v957 = vpop.f32.mrb[0].mxu0
        %v958 = vadd.f32 %v885, %v957
        %v959 = vpop.f32.mrb[0].mxu0
        %v960 = vadd.f32 %v887, %v959
        %v961 = vpop.f32.mrb[0].mxu0
        %v962 = vadd.f32 %v889, %v961
        %963 = vmatprep.mubr.bf16.mxu0 %v503
        %964 = vmatmul.mubr.bf16.gmra.mrb[0].mxu0 %v502
        %v965 = vpop.f32.mrb[0].mxu0
        %v966 = vadd.f32 %v893, %v965
        %v967 = vpop.f32.mrb[0].mxu0
        %v968 = vadd.f32 %v895, %v967
        %v969 = vpop.f32.mrb[0].mxu0
        %v970 = vadd.f32 %v897, %v969
        %v971 = vpop.f32.mrb[0].mxu0
        %v972 = vadd.f32 %v899, %v971
        %973 = vmatprep.mubr.bf16.mxu0 %v507
        %974 = vmatmul.mubr.bf16.gmra.mrb[0].mxu0 %v506
        %v975 = vpop.f32.mrb[0].mxu0
        %v976 = vadd.f32 %v903, %v975
        %v977 = vpop.f32.mrb[0].mxu0
        %v978 = vadd.f32 %v905, %v977
        %v979 = vpop.f32.mrb[0].mxu0
        %v980 = vadd.f32 %v907, %v979
        %v981 = vpop.f32.mrb[0].mxu0
        %v982 = vadd.f32 %v909, %v981
        %983 = vmatprep.mubr.bf16.mxu0 %v511
        %984 = vmatmul.mubr.bf16.gmra.mrb[0].mxu0 %v510
        %v985 = vpop.f32.mrb[0].mxu0
        %v986 = vadd.f32 %v913, %v985
        %v987 = vpop.f32.mrb[0].mxu0
        %v988 = vadd.f32 %v915, %v987
        %v989 = vpop.f32.mrb[0].mxu0
        %v990 = vadd.f32 %v917, %v989
        %v991 = vpop.f32.mrb[0].mxu0
        %v992 = vadd.f32 %v919, %v991
        %993 = vdwg.mxu0
        %v994 = vadd.f32 %v352, %v956
        %v995 = vadd.f32 %v353, %v958
        %v996 = vadd.f32 %v354, %v960
        %v997 = vadd.f32 %v355, %v962
        %v998 = vadd.f32 %v356, %v966
        %v999 = vadd.f32 %v357, %v968
        %v1000 = vadd.f32 %v358, %v970
        %v1001 = vadd.f32 %v359, %v972
        %v1002 = vadd.f32 %v360, %v976
        %v1003 = vadd.f32 %v361, %v978
        %v1004 = vadd.f32 %v362, %v980
        %v1005 = vadd.f32 %v363, %v982
        %v1006 = vadd.f32 %v364, %v986
        %v1007 = vadd.f32 %v365, %v988
        %v1008 = vadd.f32 %v366, %v990
        %v1009 = vadd.f32 %v367, %v992
        %1010 = vst [vmem:[#allocation2] sm:$0xff] %v994
        %1011 = vst [vmem:[#allocation2 + $0x8] sm:$0xff] %v995
        %1012 = vst [vmem:[#allocation2 + $0x10] sm:$0xff] %v996
        %1013 = vst [vmem:[#allocation2 + $0x18] sm:$0xff] %v997
        %1014 = vst [vmem:[#allocation2 + $0x20] sm:$0xff] %v998
        %1015 = vst [vmem:[#allocation2 + $0x28] sm:$0xff] %v999
        %1016 = vst [vmem:[#allocation2 + $0x30] sm:$0xff] %v1000
        %1017 = vst [vmem:[#allocation2 + $0x38] sm:$0xff] %v1001
        %1018 = vst [vmem:[#allocation2 + $0x40] sm:$0xff] %v1002
        %1019 = vst [vmem:[#allocation2 + $0x48] sm:$0xff] %v1003
        %1020 = vst [vmem:[#allocation2 + $0x50] sm:$0xff] %v1004
        %1021 = vst [vmem:[#allocation2 + $0x58] sm:$0xff] %v1005
        %1022 = vst [vmem:[#allocation2 + $0x60] sm:$0xff] %v1006
        %1023 = vst [vmem:[#allocation2 + $0x68] sm:$0xff] %v1007
        %1024 = vst [vmem:[#allocation2 + $0x70] sm:$0xff] %v1008
        %1025 = vst [vmem:[#allocation2 + $0x78] sm:$0xff] %v1009
        %p1026 = scmp.eq.s32.totalorder %s29, 1
        // Predicated region
        $region53: #{tpu_custom_call.1} parent=35 // pred_check
          %p1027 = pneg %p1026
        $region54: #{tpu_custom_call.1} parent=35 // pred_check_branch
          %1029 = sbr.rel (%p1027) target = $region56
        $region55: #{tpu_custom_call.1} parent=35 // pred_region
          %v1030 = vld [vmem:[#allocation2] sm:$0xff]
          %v1031 = vld [vmem:[#allocation2 + $0x8] sm:$0xff]
          %v1032 = vld [vmem:[#allocation2 + $0x10] sm:$0xff]
          %v1033 = vld [vmem:[#allocation2 + $0x18] sm:$0xff]
          %v1034 = vld [vmem:[#allocation2 + $0x20] sm:$0xff]
          %v1035 = vld [vmem:[#allocation2 + $0x28] sm:$0xff]
          %v1036 = vld [vmem:[#allocation2 + $0x30] sm:$0xff]
          %v1037 = vld [vmem:[#allocation2 + $0x38] sm:$0xff]
          %v1038 = vld [vmem:[#allocation2 + $0x40] sm:$0xff]
          %v1039 = vld [vmem:[#allocation2 + $0x48] sm:$0xff]
          %v1040 = vld [vmem:[#allocation2 + $0x50] sm:$0xff]
          %v1041 = vld [vmem:[#allocation2 + $0x58] sm:$0xff]
          %v1042 = vld [vmem:[#allocation2 + $0x60] sm:$0xff]
          %v1043 = vld [vmem:[#allocation2 + $0x68] sm:$0xff]
          %v1044 = vld [vmem:[#allocation2 + $0x70] sm:$0xff]
          %v1045 = vld [vmem:[#allocation2 + $0x78] sm:$0xff]
          %v1046 = vld [vmem:[%s328] sm:$0x3]
          %v1048 = vlaneseq
          %v1049 = vshrl.u32 %v1048, 7
          %v1050 = vsub.s32 0, %v1049
          %v1051 = vrot.slane %v1046, %v1050
          %v1052 = vlaneseq
          %v1053 = vshrl.u32 %v1052, 7
          %v1054 = vsub.s32 1, %v1053
          %v1055 = vrot.slane %v1046, %v1054
          %v1058 = vadd.f32 %v1030, %v1051
          %v1059 = vadd.f32 %v1031, %v1055
          %v1060 = vadd.f32 %v1032, %v1051
          %v1061 = vadd.f32 %v1033, %v1055
          %v1062 = vadd.f32 %v1034, %v1051
          %v1063 = vadd.f32 %v1035, %v1055
          %v1064 = vadd.f32 %v1036, %v1051
          %v1065 = vadd.f32 %v1037, %v1055
          %v1066 = vadd.f32 %v1038, %v1051
          %v1067 = vadd.f32 %v1039, %v1055
          %v1068 = vadd.f32 %v1040, %v1051
          %v1069 = vadd.f32 %v1041, %v1055
          %v1070 = vadd.f32 %v1042, %v1051
          %v1071 = vadd.f32 %v1043, %v1055
          %v1072 = vadd.f32 %v1044, %v1051
          %v1073 = vadd.f32 %v1045, %v1055
          %v1074 = vld [vmem:[#allocation8] sm:$0xff]
          %v1075 = vld [vmem:[#allocation8 + $0x8] sm:$0xff]
          %v1076 = vld [vmem:[#allocation8 + $0x10] sm:$0xff]
          %v1077 = vld [vmem:[#allocation8 + $0x18] sm:$0xff]
          %v1078 = vld [vmem:[#allocation8 + $0x20] sm:$0xff]
          %v1079 = vld [vmem:[#allocation8 + $0x28] sm:$0xff]
          %v1080 = vld [vmem:[#allocation8 + $0x30] sm:$0xff]
          %v1081 = vld [vmem:[#allocation8 + $0x38] sm:$0xff]
          %v1082 = vld [vmem:[#allocation8 + $0x40] sm:$0xff]
          %v1083 = vld [vmem:[#allocation8 + $0x48] sm:$0xff]
          %v1084 = vld [vmem:[#allocation8 + $0x50] sm:$0xff]
          %v1085 = vld [vmem:[#allocation8 + $0x58] sm:$0xff]
          %v1086 = vld [vmem:[#allocation8 + $0x60] sm:$0xff]
          %v1087 = vld [vmem:[#allocation8 + $0x68] sm:$0xff]
          %v1088 = vld [vmem:[#allocation8 + $0x70] sm:$0xff]
          %v1089 = vld [vmem:[#allocation8 + $0x78] sm:$0xff]
          %v1090 = vsub.f32 %v1058, %v1074
          %v1091 = vsub.f32 %v1059, %v1075
          %v1092 = vsub.f32 %v1060, %v1076
          %v1093 = vsub.f32 %v1061, %v1077
          %v1094 = vsub.f32 %v1062, %v1078
          %v1095 = vsub.f32 %v1063, %v1079
          %v1096 = vsub.f32 %v1064, %v1080
          %v1097 = vsub.f32 %v1065, %v1081
          %v1098 = vsub.f32 %v1066, %v1082
          %v1099 = vsub.f32 %v1067, %v1083
          %v1100 = vsub.f32 %v1068, %v1084
          %v1101 = vsub.f32 %v1069, %v1085
          %v1102 = vsub.f32 %v1070, %v1086
          %v1103 = vsub.f32 %v1071, %v1087
          %v1104 = vsub.f32 %v1072, %v1088
          %v1105 = vsub.f32 %v1073, %v1089
          %v1106 = vmul.f32 %v1090, %v1090
          %v1107 = vmul.f32 %v1091, %v1091
          %v1108 = vmul.f32 %v1092, %v1092
          %v1109 = vmul.f32 %v1093, %v1093
          %v1110 = vmul.f32 %v1094, %v1094
          %v1111 = vmul.f32 %v1095, %v1095
          %v1112 = vmul.f32 %v1096, %v1096
          %v1113 = vmul.f32 %v1097, %v1097
          %v1114 = vmul.f32 %v1098, %v1098
          %v1115 = vmul.f32 %v1099, %v1099
          %v1116 = vmul.f32 %v1100, %v1100
          %v1117 = vmul.f32 %v1101, %v1101
          %v1118 = vmul.f32 %v1102, %v1102
          %v1119 = vmul.f32 %v1103, %v1103
          %v1120 = vmul.f32 %v1104, %v1104
          %v1121 = vmul.f32 %v1105, %v1105
          %v1122 = vadd.f32 %v1106, %v1108
          %v1123 = vadd.f32 %v1107, %v1109
          %v1124 = vadd.f32 %v1122, %v1110
          %v1125 = vadd.f32 %v1123, %v1111
          %v1126 = vadd.f32 %v1124, %v1112
          %v1127 = vadd.f32 %v1125, %v1113
          %v1128 = vadd.f32 %v1126, %v1114
          %v1129 = vadd.f32 %v1127, %v1115
          %v1130 = vadd.f32 %v1128, %v1116
          %v1131 = vadd.f32 %v1129, %v1117
          %v1132 = vadd.f32 %v1130, %v1118
          %v1133 = vadd.f32 %v1131, %v1119
          %v1134 = vadd.f32 %v1132, %v1120
          %v1135 = vadd.f32 %v1133, %v1121
          %v1136 = vadd.f32 %v1134, %v1135
          %1137 = vst [vmem:[#allocation9] sm:$0xff] %v1136
        $region56: #{tpu_custom_call.1} parent=35 // pred_fallthru
          _
        // Predicated region
        $region57: #{tpu_custom_call.1} parent=35 // pred_check
          %p1138 = pneg %p171
        $region58: #{tpu_custom_call.1} parent=35 // pred_check_branch
          %1140 = sbr.rel (%p1138) target = $region60
        $region59: #{tpu_custom_call.1} parent=35 // pred_region
          %s1142 = ssub.s32 128, 128
          %1143 = vsyncadd [#allocation5], %s1142
          %s1144 = sadd.s32 %s28, %s27
          %s1145 = smul.addr %s1144, 128
          %s1146 = scalar_lea.hbm %s4, %s1145
          %s1148 = sshll.u32 [#allocation9], 4
          %s1149 = int_to_ptr.vmem [resolvable:$true] %s1148
          %1151 = dma.vmem_to_hbm [thread:$0]  %s1149, 128, %s1146, [#allocation5]
        $region60: #{tpu_custom_call.1} parent=35 // pred_fallthru
          _
        // Predicated region
        $region61: #{tpu_custom_call.1} parent=35 // pred_check
          %p1152 = pneg %p171
        $region62: #{tpu_custom_call.1} parent=35 // pred_check_branch
          %1154 = sbr.rel (%p1152) target = $region64
        $region63: #{tpu_custom_call.1} parent=35 // pred_region
          %1155 = dma.done [#allocation5], 128
        $region64: #{tpu_custom_call.1} parent=35 // pred_fallthru
          _
      $region36: #{tpu_custom_call.1} parent=5 // pred_fallthru
        _
      %p1156 = scmp.le.s32.totalorder 2, %s17
      // Predicated region
      $region65: #{tpu_custom_call.1} parent=5 // pred_check
        %p1157 = pneg %p1156
      $region66: #{tpu_custom_call.1} parent=5 // pred_check_branch
        %1159 = sbr.rel (%p1157) target = $region68
      $region67: #{tpu_custom_call.1} parent=5 // pred_region
        %s1160 = ssub.s32 %s17, 2
      $region68: #{tpu_custom_call.1} parent=5 // pred_fallthru
        _
    $region6: #{tpu_custom_call.1} parent=1 // loop_footer
      %s21 = sadd.s32 1, %s17
    $region7: #{tpu_custom_call.1} parent=1 // loop_footer_branch
      %16 = sbr.rel target = $region3
    $region8: #{tpu_custom_call.1} parent=1 // loop_exit
      _
    %1161 = vsyncpa [#allocation4], 1
    %s1162 = scalar_lea.sflag [#allocation4], 1
    %1163 = vsyncpa %s1162, 1
    %1164 = vsyncpa [#allocation7], 1
    %s1165 = scalar_lea.sflag [#allocation7], 1
    %1166 = vsyncpa %s1165, 1
    %1167 = vsyncpa [#allocation5], 1
    %s1168 = scalar_lea.sflag [#allocation5], 1
    %1169 = vsyncpa %s1168, 1

</llo_original>
